<compile_context>
chip_gen: v7x
topology: tpu7x:2x2x1
jax: 0.10.0
libtpu: 0.0.40
codegen_flags: <defaults>
</compile_context>

<pallas_src>
import jax
import jax.numpy as jnp
from jax import lax
from jax.experimental import pallas as pl
from jax.experimental.pallas import tpu as pltpu


def _invariant_filter_kernel(m_ref, w_ref, b_ref, o1_ref, o2_ref, o3_ref):
    # m_ref:  (TN, F)     VMEM row tile of m_ij
    # w_ref:  (3, F, F)   VMEM resident weight (PyTorch out x in, per filter)
    # b_ref:  (3, 1, F)   VMEM resident bias
    # o*_ref: (TN, F)     VMEM output row tiles (one per filter)
    m = m_ref[...]
    outs = (o1_ref, o2_ref, o3_ref)
    for k in range(3):
        # out_k = m @ W_k.T  (contract m's F axis with W_k's in-feature axis).
        acc = lax.dot_general(
            m,
            w_ref[k],
            dimension_numbers=(((1,), (1,)), ((), ())),
            preferred_element_type=jnp.float32,
        )
        outs[k][...] = (acc + b_ref[k].astype(jnp.float32)).astype(outs[k].dtype)


def _choose_row_tile(N, F, itemsize):
    # Pipelined VMEM per row: input (F) + 3 outputs (3F), double-buffered.
    budget_bytes = 8 * 1024 * 1024
    per_row = 2 * 4 * F * itemsize
    tn = budget_bytes // max(per_row, 1)
    tn = max(8, min(2048, (tn // 8) * 8))
    n_pad = ((N + 7) // 8) * 8
    return min(tn, n_pad)


def invariant_filter(m_ij, weight, bias, *, row_tile=None):
    """Equivalent of InvariantFilter.forward.

    m_ij:   [N, F]
    weight: [3F, F]   (PyTorch nn.Linear layout: out_features x in_features)
    bias:   [3F]
    returns (filter1, filter2, filter3), each [N, F]
    """
    N, F = m_ij.shape
    out_f, in_f = weight.shape
    assert in_f == F and out_f == 3 * F
    assert bias.shape == (out_f,)

    # Cheap reshapes of the tiny parameters (no transpose copy of the weight).
    w3 = weight.reshape(3, F, F)
    b3 = bias.reshape(3, 1, F)

    tn = row_tile if row_tile is not None else _choose_row_tile(
        N, F, m_ij.dtype.itemsize)
    grid = (pl.cdiv(N, tn),)

    flops = 2 * N * F * (3 * F)
    bytes_accessed = (
        (m_ij.size + weight.size + bias.size + 3 * N * F) * m_ij.dtype.itemsize)

    out_shapes = tuple(
        jax.ShapeDtypeStruct((N, F), m_ij.dtype) for _ in range(3))
    out_spec = pl.BlockSpec((tn, F), lambda i: (i, 0))

    f1, f2, f3 = pl.pallas_call(
        _invariant_filter_kernel,
        out_shape=out_shapes,
        grid_spec=pltpu.PrefetchScalarGridSpec(
            num_scalar_prefetch=0,
            grid=grid,
            in_specs=[
                pl.BlockSpec((tn, F), lambda i: (i, 0)),       # m_ij row tile
                pl.BlockSpec((3, F, F), lambda i: (0, 0, 0)),  # resident weight
                pl.BlockSpec((3, 1, F), lambda i: (0, 0, 0)),  # resident bias
            ],
            out_specs=[out_spec, out_spec, out_spec],
        ),
        compiler_params=pltpu.CompilerParams(
            dimension_semantics=("parallel",),
        ),
        cost_estimate=pl.CostEstimate(
            flops=flops, transcendentals=0, bytes_accessed=bytes_accessed),
    )(m_ij, w3, b3)
    return f1, f2, f3


if __name__ == "__main__":
    key = jax.random.PRNGKey(0)
    k_m, k_w, k_b, k_m2 = jax.random.split(key, 4)

    feat_dim = 32

    # Deterministic synthetic parameters (nn.Linear: weight [3F, F], bias [3F]).
    weight = jax.random.normal(
        k_w, (3 * feat_dim, feat_dim), dtype=jnp.float32) * 0.1
    bias = jax.random.normal(k_b, (3 * feat_dim,), dtype=jnp.float32) * 0.1

    def reference(m):
        return (m @ weight.T + bias).reshape(m.shape[0], 3, feat_dim)

    # Case 1: small N (single tile).
    N = 8
    m_ij = jax.random.normal(k_m, (N, feat_dim), dtype=jnp.float32)
    f1, f2, f3 = invariant_filter(m_ij, weight, bias)
    jax.block_until_ready((f1, f2, f3))
    ref = reference(m_ij)
    assert jnp.allclose(f1, ref[:, 0, :], atol=1e-5)
    assert jnp.allclose(f2, ref[:, 1, :], atol=1e-5)
    assert jnp.allclose(f3, ref[:, 2, :], atol=1e-5)

    # Case 2: multi-tile grid with a ragged final tile (exercises pipelining
    # and masked edge stores).
    N2 = 200
    m_ij2 = jax.random.normal(k_m2, (N2, feat_dim), dtype=jnp.float32)
    g1, g2, g3 = invariant_filter(m_ij2, weight, bias, row_tile=64)
    jax.block_until_ready((g1, g2, g3))
    ref2 = reference(m_ij2)
    assert jnp.allclose(g1, ref2[:, 0, :], atol=1e-5)
    assert jnp.allclose(g2, ref2[:, 1, :], atol=1e-5)
    assert jnp.allclose(g3, ref2[:, 2, :], atol=1e-5)

    print("KERNEL_OK")
</pallas_src>

<mosaic_0001>
module attributes {stable_mosaic.version = 11 : i64} {
  func.func @_invariant_filter_kernel(%arg0: i32, %arg1: memref<8x32xf32, #tpu.memory_space<vmem>>, %arg2: memref<3x32x32xf32, #tpu.memory_space<vmem>>, %arg3: memref<3x1x32xf32, #tpu.memory_space<vmem>>, %arg4: memref<8x32xf32, #tpu.memory_space<vmem>>, %arg5: memref<8x32xf32, #tpu.memory_space<vmem>>, %arg6: memref<8x32xf32, #tpu.memory_space<vmem>>) attributes {dimension_semantics = [#tpu.dimension_semantics<parallel>], iteration_bounds = array<i64: 1>, scalar_prefetch = 0 : i64, scratch_operands = 0 : i64, tpu.core_type = #tpu.core_type<tc>, window_params = [{transform_indices = @transform_0, window_bounds = array<i64: 8, 32>}, {pipeline_mode = #tpu.pipeline_mode<synchronous>, transform_indices = @transform_1, window_bounds = array<i64: 3, 32, 32>}, {pipeline_mode = #tpu.pipeline_mode<synchronous>, transform_indices = @transform_2, window_bounds = array<i64: 3, 1, 32>}, {transform_indices = @transform_3, window_bounds = array<i64: 8, 32>}, {transform_indices = @transform_4, window_bounds = array<i64: 8, 32>}, {transform_indices = @transform_5, window_bounds = array<i64: 8, 32>}]} {
    %c0 = arith.constant 0 : index
    %c0_0 = arith.constant 0 : index
    %0 = vector.load %arg1[%c0, %c0_0] : memref<8x32xf32, #tpu.memory_space<vmem>>, vector<8x32xf32>
    %c0_1 = arith.constant 0 : index
    %c0_2 = arith.constant 0 : index
    %c0_3 = arith.constant 0 : index
    %1 = vector.load %arg2[%c0_1, %c0_2, %c0_3] : memref<3x32x32xf32, #tpu.memory_space<vmem>>, vector<1x32x32xf32>
    %2 = vector.shape_cast %1 : vector<1x32x32xf32> to vector<32x32xf32>
    %cst = arith.constant dense<0.000000e+00> : vector<8x32xf32>
    %3 = tpu.matmul %0, %2, %cst {dimension_numbers = #tpu.dot_dimension_numbers<[1], [1], [0], [0], [0, 0, 1, 0], [], []>} : vector<8x32xf32>, vector<32x32xf32>, vector<8x32xf32> -> vector<8x32xf32>
    %c0_4 = arith.constant 0 : index
    %c0_5 = arith.constant 0 : index
    %c0_6 = arith.constant 0 : index
    %4 = vector.load %arg3[%c0_4, %c0_5, %c0_6] : memref<3x1x32xf32, #tpu.memory_space<vmem>>, vector<1x1x32xf32>
    %5 = vector.shape_cast %4 : vector<1x1x32xf32> to vector<1x32xf32>
    %6 = vector.broadcast %5 : vector<1x32xf32> to vector<8x32xf32>
    %7 = arith.addf %3, %6 : vector<8x32xf32>
    %c0_7 = arith.constant 0 : index
    %c0_8 = arith.constant 0 : index
    %8 = vector.load %arg4[%c0_7, %c0_8] : memref<8x32xf32, #tpu.memory_space<vmem>>, vector<8x32xf32>
    tpu.vector_store %arg4[%c0_7, %c0_8], %7 {strides = array<i32>} : memref<8x32xf32, #tpu.memory_space<vmem>>, vector<8x32xf32>,
    %c1 = arith.constant 1 : index
    %c0_9 = arith.constant 0 : index
    %c0_10 = arith.constant 0 : index
    %9 = vector.load %arg2[%c1, %c0_9, %c0_10] : memref<3x32x32xf32, #tpu.memory_space<vmem>>, vector<1x32x32xf32>
    %10 = vector.shape_cast %9 : vector<1x32x32xf32> to vector<32x32xf32>
    %cst_11 = arith.constant dense<0.000000e+00> : vector<8x32xf32>
    %11 = tpu.matmul %0, %10, %cst_11 {dimension_numbers = #tpu.dot_dimension_numbers<[1], [1], [0], [0], [0, 0, 1, 0], [], []>} : vector<8x32xf32>, vector<32x32xf32>, vector<8x32xf32> -> vector<8x32xf32>
    %c1_12 = arith.constant 1 : index
    %c0_13 = arith.constant 0 : index
    %c0_14 = arith.constant 0 : index
    %12 = vector.load %arg3[%c1_12, %c0_13, %c0_14] : memref<3x1x32xf32, #tpu.memory_space<vmem>>, vector<1x1x32xf32>
    %13 = vector.shape_cast %12 : vector<1x1x32xf32> to vector<1x32xf32>
    %14 = vector.broadcast %13 : vector<1x32xf32> to vector<8x32xf32>
    %15 = arith.addf %11, %14 : vector<8x32xf32>
    %c0_15 = arith.constant 0 : index
    %c0_16 = arith.constant 0 : index
    %16 = vector.load %arg5[%c0_15, %c0_16] : memref<8x32xf32, #tpu.memory_space<vmem>>, vector<8x32xf32>
    tpu.vector_store %arg5[%c0_15, %c0_16], %15 {strides = array<i32>} : memref<8x32xf32, #tpu.memory_space<vmem>>, vector<8x32xf32>,
    %c2 = arith.constant 2 : index
    %c0_17 = arith.constant 0 : index
    %c0_18 = arith.constant 0 : index
    %17 = vector.load %arg2[%c2, %c0_17, %c0_18] : memref<3x32x32xf32, #tpu.memory_space<vmem>>, vector<1x32x32xf32>
    %18 = vector.shape_cast %17 : vector<1x32x32xf32> to vector<32x32xf32>
    %cst_19 = arith.constant dense<0.000000e+00> : vector<8x32xf32>
    %19 = tpu.matmul %0, %18, %cst_19 {dimension_numbers = #tpu.dot_dimension_numbers<[1], [1], [0], [0], [0, 0, 1, 0], [], []>} : vector<8x32xf32>, vector<32x32xf32>, vector<8x32xf32> -> vector<8x32xf32>
    %c2_20 = arith.constant 2 : index
    %c0_21 = arith.constant 0 : index
    %c0_22 = arith.constant 0 : index
    %20 = vector.load %arg3[%c2_20, %c0_21, %c0_22] : memref<3x1x32xf32, #tpu.memory_space<vmem>>, vector<1x1x32xf32>
    %21 = vector.shape_cast %20 : vector<1x1x32xf32> to vector<1x32xf32>
    %22 = vector.broadcast %21 : vector<1x32xf32> to vector<8x32xf32>
    %23 = arith.addf %19, %22 : vector<8x32xf32>
    %c0_23 = arith.constant 0 : index
    %c0_24 = arith.constant 0 : index
    %24 = vector.load %arg6[%c0_23, %c0_24] : memref<8x32xf32, #tpu.memory_space<vmem>>, vector<8x32xf32>
    tpu.vector_store %arg6[%c0_23, %c0_24], %23 {strides = array<i32>} : memref<8x32xf32, #tpu.memory_space<vmem>>, vector<8x32xf32>,
    return
  }
  func.func @transform_0(%arg0: i32) -> (i32, i32) {
    %c0_i32 = arith.constant 0 : i32
    %c0_i32_0 = arith.constant 0 : i32
    return %arg0, %c0_i32 : i32, i32
  }
  func.func @transform_1(%arg0: i32) -> (i32, i32, i32) {
    %c0_i32 = arith.constant 0 : i32
    %c0_i32_0 = arith.constant 0 : i32
    %c0_i32_1 = arith.constant 0 : i32
    %c0_i32_2 = arith.constant 0 : i32
    return %c0_i32, %c0_i32_0, %c0_i32_1 : i32, i32, i32
  }
  func.func @transform_2(%arg0: i32) -> (i32, i32, i32) {
    %c0_i32 = arith.constant 0 : i32
    %c0_i32_0 = arith.constant 0 : i32
    %c0_i32_1 = arith.constant 0 : i32
    %c0_i32_2 = arith.constant 0 : i32
    return %c0_i32, %c0_i32_0, %c0_i32_1 : i32, i32, i32
  }
  func.func @transform_3(%arg0: i32) -> (i32, i32) {
    %c0_i32 = arith.constant 0 : i32
    %c0_i32_0 = arith.constant 0 : i32
    return %arg0, %c0_i32 : i32, i32
  }
  func.func @transform_4(%arg0: i32) -> (i32, i32) {
    %c0_i32 = arith.constant 0 : i32
    %c0_i32_0 = arith.constant 0 : i32
    return %arg0, %c0_i32 : i32, i32
  }
  func.func @transform_5(%arg0: i32) -> (i32, i32) {
    %c0_i32 = arith.constant 0 : i32
    %c0_i32_0 = arith.constant 0 : i32
    return %arg0, %c0_i32 : i32, i32
  }
}

</mosaic_0001>

<llo_original>
// kernel: tpu_custom_call.1
$region0: #{tpu_custom_call.1}
  #allocation0 [shape = 'u32[]', space=smem, size = 0x4, offset = 0x4, fixed_abs, tag = 'smem constant byte address 0x4 - core index']
  #allocation1 [shape = 'u32[144,128]{1,0:T(1,128)}', space=vmem, size = 0x12000, scoped, tag = 'internal scratch']
  %s0 = inlined_call_operand.hbm [shape: f32[8,32], index: 0, kind: input, shape index: {}]
  %s1 = inlined_call_operand.hbm [shape: f32[3,32,32], index: 1, kind: input, shape index: {}]
  %s2 = inlined_call_operand.vmem [shape: f32[3,1,32], index: 2, kind: input, shape index: {}]
  %s3 = inlined_call_operand.hbm [shape: f32[8,32], index: 3, kind: output, shape index: {0}]
  %s4 = inlined_call_operand.hbm [shape: f32[8,32], index: 4, kind: output, shape index: {1}]
  %s5 = inlined_call_operand.hbm [shape: f32[8,32], index: 5, kind: output, shape index: {2}]
  %6 = xla_tuple %s3, %s4, %s5
  %s7 = sld [smem:[#allocation0]]
  $region46: #{tpu_custom_call.1} parent=0
    _
  %s9 = ssub.s32 1, %s7
  %s10 = scalar_select 0, %s9, %s7
  $region1: #{tpu_custom_call.1} parent=0
    #allocation2 [shape = 'u8[4096]{0}', space=vmem, size = 0x1000, scoped, tag = 'input window, operand 0, single buffered']
    #allocation3 [shape = 's32[1]{0}', space=sflag, size = 0x4, scoped, tag = 'scoped memory for tpu_custom_call.1']
    #allocation4 [shape = 's32[1]{0}', space=sflag, size = 0x4, scoped, tag = 'scoped memory for tpu_custom_call.1']
    #allocation5 [shape = 'u8[49152]{0}', space=vmem, size = 0xc000, scoped, tag = 'input window, operand 1, single buffered']
    #allocation6 [shape = 's32[1]{0}', space=sflag, size = 0x4, scoped, tag = 'scoped memory for tpu_custom_call.1']
    #allocation7 [shape = 'u8[4096]{0}', space=vmem, size = 0x1000, scoped, tag = 'output window, operand 0, single buffered']
    #allocation8 [shape = 'u8[4096]{0}', space=vmem, size = 0x1000, scoped, tag = 'output window, operand 1, single buffered']
    #allocation9 [shape = 's32[1]{0}', space=sflag, size = 0x4, scoped, tag = 'scoped memory for tpu_custom_call.1']
    #allocation10 [shape = 'u8[4096]{0}', space=vmem, size = 0x1000, scoped, tag = 'output window, operand 2, single buffered']
    %11 = vsyncpa [#allocation3], 0
    %12 = vsyncpa [#allocation6], 0
    %13 = vsyncpa [#allocation4], 0
    %14 = vsyncpa [#allocation9], 0
    // Predicated region
    $region2: #{tpu_custom_call.1} parent=1 // pred_check
      _
    $region3: #{tpu_custom_call.1} parent=1 // pred_check_branch
      %16 = sbr.rel (0) target = $region5
    $region4: #{tpu_custom_call.1} parent=1 // pred_region
      %s18 = ssub.s32 128, 128
      %19 = vsyncadd [#allocation3], %s18
      %s21 = sshll.u32 [#allocation2], 4
      %s22 = int_to_ptr.vmem [resolvable:$true] %s21
      %24 = dma.hbm_to_vmem [thread:$0]  %s0, 128, %s22, [#allocation3]
    $region5: #{tpu_custom_call.1} parent=1 // pred_fallthru
      _
    // Predicated region
    $region6: #{tpu_custom_call.1} parent=1 // pred_check
      _
    $region7: #{tpu_custom_call.1} parent=1 // pred_check_branch
      %26 = sbr.rel (0) target = $region9
    $region8: #{tpu_custom_call.1} parent=1 // pred_region
      %s28 = ssub.s32 1536, 1536
      %29 = vsyncadd [#allocation6], %s28
      %s30 = sshll.u32 [#allocation5], 4
      %s31 = int_to_ptr.vmem [resolvable:$true] %s30
      %36 = dma.hbm_to_vmem [thread:$0]  %s1, 1536, %s31, [#allocation6], 128, 128, 8
    $region9: #{tpu_custom_call.1} parent=1 // pred_fallthru
      _
    // Predicated region
    $region10: #{tpu_custom_call.1} parent=1 // pred_check
      _
    $region11: #{tpu_custom_call.1} parent=1 // pred_check_branch
      %38 = sbr.rel (0) target = $region13
    $region12: #{tpu_custom_call.1} parent=1 // pred_region
      _
    $region13: #{tpu_custom_call.1} parent=1 // pred_fallthru
      _
    // Predicated region
    $region14: #{tpu_custom_call.1} parent=1 // pred_check
      _
    $region15: #{tpu_custom_call.1} parent=1 // pred_check_branch
      %40 = sbr.rel (0) target = $region17
    $region16: #{tpu_custom_call.1} parent=1 // pred_region
      %41 = dma.done [#allocation3], 128
    $region17: #{tpu_custom_call.1} parent=1 // pred_fallthru
      _
    // Predicated region
    $region18: #{tpu_custom_call.1} parent=1 // pred_check
      _
    $region19: #{tpu_custom_call.1} parent=1 // pred_check_branch
      %43 = sbr.rel (0) target = $region21
    $region20: #{tpu_custom_call.1} parent=1 // pred_region
      %44 = dma.done [#allocation6], 1536
    $region21: #{tpu_custom_call.1} parent=1 // pred_fallthru
      _
    %v45 = vld [vmem:[#allocation2] sm:$0xff]
    %v46 = vld [vmem:[#allocation5] sm:$0xff]
    %v47 = vld [vmem:[#allocation5 + $0x8] sm:$0xff]
    %v48 = vld [vmem:[#allocation5 + $0x10] sm:$0xff]
    %v49 = vld [vmem:[#allocation5 + $0x18] sm:$0xff]
    %v50 = vld [vmem:[%s2] sm:$0x1]
    %v52 = vlaneseq
    %v53 = vshrl.u32 %v52, 7
    %v54 = vsub.s32 0, %v53
    %v55 = vrot.slane %v50, %v54
    %vm57 = vcmask 261120
    %v59 = vsel %vm57, %v45, 0
    %v62 = vsel %vm57, %v46, 0
    %v65 = vsel %vm57, %v47, 0
    %v68 = vsel %vm57, %v48, 0
    %v71 = vsel %vm57, %v49, 0
    %73 = vmatprep.subr.mxu0 0.0
    %74 = vmatpush1.xpose.msra.mxu0 %v62
    %75 = vmatprep.subr.mxu0 0.0
    %76 = vmatpush1.xpose.msra.mxu0 %v65
    %77 = vmatprep.subr.mxu0 0.0
    %78 = vmatpush1.xpose.msra.mxu0 %v68
    %79 = vmatprep.subr.mxu0 0.0
    %80 = vmatpush1.xpose.msra.mxu0 %v71
    %81 = vmatprep.subr.mxu0 0.0
    %82 = vmatpush1.xpose.msra.mxu0 0.0
    %83 = vmatprep.subr.mxu0 0.0
    %84 = vmatpush1.xpose.msra.mxu0 0.0
    %85 = vmatprep.subr.mxu0 0.0
    %86 = vmatpush1.xpose.msra.mxu0 0.0
    %87 = vmatprep.subr.mxu0 0.0
    %88 = vmatpush1.xpose.msra.mxu0 0.0
    %89 = vmatprep.subr.mxu0 0.0
    %90 = vmatpush1.xpose.msra.mxu0 0.0
    %91 = vmatprep.subr.mxu0 0.0
    %92 = vmatpush1.xpose.msra.mxu0 0.0
    %93 = vmatprep.subr.mxu0 0.0
    %94 = vmatpush1.xpose.msra.mxu0 0.0
    %95 = vmatprep.subr.mxu0 0.0
    %96 = vmatpush1.xpose.msra.mxu0 0.0
    %97 = vmatprep.subr.mxu0 0.0
    %98 = vmatpush1.xpose.msra.mxu0 0.0
    %99 = vmatprep.subr.mxu0 0.0
    %100 = vmatpush1.xpose.msra.mxu0 0.0
    %101 = vmatprep.subr.mxu0 0.0
    %102 = vmatpush1.xpose.msra.mxu0 0.0
    %103 = vmatprep.subr.mxu0 0.0
    %104 = vmatpush1.xpose.msra.mxu0 0.0
    %105 = vmatprep.subr.mxu0 0.0
    %106 = vmatpush1.xpose.msra.mxu0 0.0
    %107 = vmatprep.subr.mxu0 0.0
    %108 = vmatpush1.xpose.msra.mxu0 0.0
    %109 = vmatprep.subr.mxu0 0.0
    %110 = vmatpush1.xpose.msra.mxu0 0.0
    %111 = vmatprep.subr.mxu0 0.0
    %112 = vmatpush1.xpose.msra.mxu0 0.0
    %113 = vmatprep.subr.mxu0 0.0
    %114 = vmatpush1.xpose.msra.mxu0 0.0
    %115 = vmatprep.subr.mxu0 0.0
    %116 = vmatpush1.xpose.msra.mxu0 0.0
    %117 = vmatprep.subr.mxu0 0.0
    %118 = vmatpush1.xpose.msra.mxu0 0.0
    %119 = vmatprep.subr.mxu0 0.0
    %120 = vmatpush1.xpose.msra.mxu0 0.0
    %121 = vmatprep.subr.mxu0 0.0
    %122 = vmatpush1.xpose.msra.mxu0 0.0
    %123 = vmatprep.subr.mxu0 0.0
    %124 = vmatpush1.xpose.msra.mxu0 0.0
    %125 = vmatprep.subr.mxu0 0.0
    %126 = vmatpush1.xpose.msra.mxu0 0.0
    %127 = vmatprep.subr.mxu0 0.0
    %128 = vmatpush1.xpose.msra.mxu0 0.0
    %129 = vmatprep.subr.mxu0 0.0
    %130 = vmatpush1.xpose.msra.mxu0 0.0
    %131 = vmatprep.subr.mxu0 0.0
    %132 = vmatpush1.xpose.msra.mxu0 0.0
    %133 = vmatprep.subr.mxu0 0.0
    %134 = vmatpush1.xpose.msra.mxu0 0.0
    %135 = vmatprep.subr.mxu0 0.0
    %136 = vmatpush1.xpose.msra.mxu0 0.0
    %137 = vmatprep.mubr.f32.mxu0 0.0
    %138 = vmatmul.mubr.f32.gmra.mrb[0].mxu0 %v59
    %v139 = vpop.f32.mrb[0].mxu0
    %v140 = vadd.f32 %v55, %v139
    %v141 = vpop.f32.mrb[0].mxu0
    %142 = vdwg.mxu0
    %143 = vst.msk [vmem:[#allocation7] sm:$0xff] %vm57, %v140
    %s144 = scalar_lea.vmem [#allocation5], 32
    %v145 = vld [vmem:[%s144] sm:$0xff]
    %v146 = vld [vmem:[%s144 + $0x8] sm:$0xff]
    %v147 = vld [vmem:[%s144 + $0x10] sm:$0xff]
    %v148 = vld [vmem:[%s144 + $0x18] sm:$0xff]
    %s149 = scalar_lea.vmem %s2, 1
    %v150 = vld [vmem:[%s149] sm:$0x1]
    %v152 = vlaneseq
    %v153 = vshrl.u32 %v152, 7
    %v154 = vsub.s32 0, %v153
    %v155 = vrot.slane %v150, %v154
    %v158 = vsel %vm57, %v145, 0
    %v161 = vsel %vm57, %v146, 0
    %v164 = vsel %vm57, %v147, 0
    %v167 = vsel %vm57, %v148, 0
    %169 = vmatprep.subr.mxu0 0.0
    %170 = vmatpush1.xpose.msra.mxu0 %v158
    %171 = vmatprep.subr.mxu0 0.0
    %172 = vmatpush1.xpose.msra.mxu0 %v161
    %173 = vmatprep.subr.mxu0 0.0
    %174 = vmatpush1.xpose.msra.mxu0 %v164
    %175 = vmatprep.subr.mxu0 0.0
    %176 = vmatpush1.xpose.msra.mxu0 %v167
    %177 = vmatprep.subr.mxu0 0.0
    %178 = vmatpush1.xpose.msra.mxu0 0.0
    %179 = vmatprep.subr.mxu0 0.0
    %180 = vmatpush1.xpose.msra.mxu0 0.0
    %181 = vmatprep.subr.mxu0 0.0
    %182 = vmatpush1.xpose.msra.mxu0 0.0
    %183 = vmatprep.subr.mxu0 0.0
    %184 = vmatpush1.xpose.msra.mxu0 0.0
    %185 = vmatprep.subr.mxu0 0.0
    %186 = vmatpush1.xpose.msra.mxu0 0.0
    %187 = vmatprep.subr.mxu0 0.0
    %188 = vmatpush1.xpose.msra.mxu0 0.0
    %189 = vmatprep.subr.mxu0 0.0
    %190 = vmatpush1.xpose.msra.mxu0 0.0
    %191 = vmatprep.subr.mxu0 0.0
    %192 = vmatpush1.xpose.msra.mxu0 0.0
    %193 = vmatprep.subr.mxu0 0.0
    %194 = vmatpush1.xpose.msra.mxu0 0.0
    %195 = vmatprep.subr.mxu0 0.0
    %196 = vmatpush1.xpose.msra.mxu0 0.0
    %197 = vmatprep.subr.mxu0 0.0
    %198 = vmatpush1.xpose.msra.mxu0 0.0
    %199 = vmatprep.subr.mxu0 0.0
    %200 = vmatpush1.xpose.msra.mxu0 0.0
    %201 = vmatprep.subr.mxu0 0.0
    %202 = vmatpush1.xpose.msra.mxu0 0.0
    %203 = vmatprep.subr.mxu0 0.0
    %204 = vmatpush1.xpose.msra.mxu0 0.0
    %205 = vmatprep.subr.mxu0 0.0
    %206 = vmatpush1.xpose.msra.mxu0 0.0
    %207 = vmatprep.subr.mxu0 0.0
    %208 = vmatpush1.xpose.msra.mxu0 0.0
    %209 = vmatprep.subr.mxu0 0.0
    %210 = vmatpush1.xpose.msra.mxu0 0.0
    %211 = vmatprep.subr.mxu0 0.0
    %212 = vmatpush1.xpose.msra.mxu0 0.0
    %213 = vmatprep.subr.mxu0 0.0
    %214 = vmatpush1.xpose.msra.mxu0 0.0
    %215 = vmatprep.subr.mxu0 0.0
    %216 = vmatpush1.xpose.msra.mxu0 0.0
    %217 = vmatprep.subr.mxu0 0.0
    %218 = vmatpush1.xpose.msra.mxu0 0.0
    %219 = vmatprep.subr.mxu0 0.0
    %220 = vmatpush1.xpose.msra.mxu0 0.0
    %221 = vmatprep.subr.mxu0 0.0
    %222 = vmatpush1.xpose.msra.mxu0 0.0
    %223 = vmatprep.subr.mxu0 0.0
    %224 = vmatpush1.xpose.msra.mxu0 0.0
    %225 = vmatprep.subr.mxu0 0.0
    %226 = vmatpush1.xpose.msra.mxu0 0.0
    %227 = vmatprep.subr.mxu0 0.0
    %228 = vmatpush1.xpose.msra.mxu0 0.0
    %229 = vmatprep.subr.mxu0 0.0
    %230 = vmatpush1.xpose.msra.mxu0 0.0
    %231 = vmatprep.subr.mxu0 0.0
    %232 = vmatpush1.xpose.msra.mxu0 0.0
    %233 = vmatprep.mubr.f32.mxu0 0.0
    %234 = vmatmul.mubr.f32.gmra.mrb[0].mxu0 %v59
    %v235 = vpop.f32.mrb[0].mxu0
    %v236 = vadd.f32 %v155, %v235
    %v237 = vpop.f32.mrb[0].mxu0
    %238 = vdwg.mxu0
    %239 = vst.msk [vmem:[#allocation8] sm:$0xff] %vm57, %v236
    %s240 = scalar_lea.vmem [#allocation5], 64
    %v241 = vld [vmem:[%s240] sm:$0xff]
    %v242 = vld [vmem:[%s240 + $0x8] sm:$0xff]
    %v243 = vld [vmem:[%s240 + $0x10] sm:$0xff]
    %v244 = vld [vmem:[%s240 + $0x18] sm:$0xff]
    %s245 = scalar_lea.vmem %s2, 2
    %v246 = vld [vmem:[%s245] sm:$0x1]
    %v248 = vlaneseq
    %v249 = vshrl.u32 %v248, 7
    %v250 = vsub.s32 0, %v249
    %v251 = vrot.slane %v246, %v250
    %v254 = vsel %vm57, %v241, 0
    %v257 = vsel %vm57, %v242, 0
    %v260 = vsel %vm57, %v243, 0
    %v263 = vsel %vm57, %v244, 0
    %265 = vmatprep.subr.mxu0 0.0
    %266 = vmatpush1.xpose.msra.mxu0 %v254
    %267 = vmatprep.subr.mxu0 0.0
    %268 = vmatpush1.xpose.msra.mxu0 %v257
    %269 = vmatprep.subr.mxu0 0.0
    %270 = vmatpush1.xpose.msra.mxu0 %v260
    %271 = vmatprep.subr.mxu0 0.0
    %272 = vmatpush1.xpose.msra.mxu0 %v263
    %273 = vmatprep.subr.mxu0 0.0
    %274 = vmatpush1.xpose.msra.mxu0 0.0
    %275 = vmatprep.subr.mxu0 0.0
    %276 = vmatpush1.xpose.msra.mxu0 0.0
    %277 = vmatprep.subr.mxu0 0.0
    %278 = vmatpush1.xpose.msra.mxu0 0.0
    %279 = vmatprep.subr.mxu0 0.0
    %280 = vmatpush1.xpose.msra.mxu0 0.0
    %281 = vmatprep.subr.mxu0 0.0
    %282 = vmatpush1.xpose.msra.mxu0 0.0
    %283 = vmatprep.subr.mxu0 0.0
    %284 = vmatpush1.xpose.msra.mxu0 0.0
    %285 = vmatprep.subr.mxu0 0.0
    %286 = vmatpush1.xpose.msra.mxu0 0.0
    %287 = vmatprep.subr.mxu0 0.0
    %288 = vmatpush1.xpose.msra.mxu0 0.0
    %289 = vmatprep.subr.mxu0 0.0
    %290 = vmatpush1.xpose.msra.mxu0 0.0
    %291 = vmatprep.subr.mxu0 0.0
    %292 = vmatpush1.xpose.msra.mxu0 0.0
    %293 = vmatprep.subr.mxu0 0.0
    %294 = vmatpush1.xpose.msra.mxu0 0.0
    %295 = vmatprep.subr.mxu0 0.0
    %296 = vmatpush1.xpose.msra.mxu0 0.0
    %297 = vmatprep.subr.mxu0 0.0
    %298 = vmatpush1.xpose.msra.mxu0 0.0
    %299 = vmatprep.subr.mxu0 0.0
    %300 = vmatpush1.xpose.msra.mxu0 0.0
    %301 = vmatprep.subr.mxu0 0.0
    %302 = vmatpush1.xpose.msra.mxu0 0.0
    %303 = vmatprep.subr.mxu0 0.0
    %304 = vmatpush1.xpose.msra.mxu0 0.0
    %305 = vmatprep.subr.mxu0 0.0
    %306 = vmatpush1.xpose.msra.mxu0 0.0
    %307 = vmatprep.subr.mxu0 0.0
    %308 = vmatpush1.xpose.msra.mxu0 0.0
    %309 = vmatprep.subr.mxu0 0.0
    %310 = vmatpush1.xpose.msra.mxu0 0.0
    %311 = vmatprep.subr.mxu0 0.0
    %312 = vmatpush1.xpose.msra.mxu0 0.0
    %313 = vmatprep.subr.mxu0 0.0
    %314 = vmatpush1.xpose.msra.mxu0 0.0
    %315 = vmatprep.subr.mxu0 0.0
    %316 = vmatpush1.xpose.msra.mxu0 0.0
    %317 = vmatprep.subr.mxu0 0.0
    %318 = vmatpush1.xpose.msra.mxu0 0.0
    %319 = vmatprep.subr.mxu0 0.0
    %320 = vmatpush1.xpose.msra.mxu0 0.0
    %321 = vmatprep.subr.mxu0 0.0
    %322 = vmatpush1.xpose.msra.mxu0 0.0
    %323 = vmatprep.subr.mxu0 0.0
    %324 = vmatpush1.xpose.msra.mxu0 0.0
    %325 = vmatprep.subr.mxu0 0.0
    %326 = vmatpush1.xpose.msra.mxu0 0.0
    %327 = vmatprep.subr.mxu0 0.0
    %328 = vmatpush1.xpose.msra.mxu0 0.0
    %329 = vmatprep.mubr.f32.mxu0 0.0
    %330 = vmatmul.mubr.f32.gmra.mrb[0].mxu0 %v59
    %v331 = vpop.f32.mrb[0].mxu0
    %v332 = vadd.f32 %v251, %v331
    %v333 = vpop.f32.mrb[0].mxu0
    %334 = vdwg.mxu0
    %335 = vst.msk [vmem:[#allocation10] sm:$0xff] %vm57, %v332
    // Predicated region
    $region22: #{tpu_custom_call.1} parent=1 // pred_check
      _
    $region23: #{tpu_custom_call.1} parent=1 // pred_check_branch
      %337 = sbr.rel (0) target = $region25
    $region24: #{tpu_custom_call.1} parent=1 // pred_region
      %s339 = ssub.s32 128, 128
      %340 = vsyncadd [#allocation4], %s339
      %s342 = sshll.u32 [#allocation7], 4
      %s343 = int_to_ptr.vmem [resolvable:$true] %s342
      %345 = dma.vmem_to_hbm [thread:$0]  %s343, 128, %s3, [#allocation4]
    $region25: #{tpu_custom_call.1} parent=1 // pred_fallthru
      _
    // Predicated region
    $region26: #{tpu_custom_call.1} parent=1 // pred_check
      _
    $region27: #{tpu_custom_call.1} parent=1 // pred_check_branch
      %347 = sbr.rel (0) target = $region29
    $region28: #{tpu_custom_call.1} parent=1 // pred_region
      %s349 = ssub.s32 128, 128
      %350 = vsyncadd [#allocation9], %s349
      %s352 = sshll.u32 [#allocation8], 4
      %s353 = int_to_ptr.vmem [resolvable:$true] %s352
      %355 = dma.vmem_to_hbm [thread:$0]  %s353, 128, %s4, [#allocation9]
    $region29: #{tpu_custom_call.1} parent=1 // pred_fallthru
      _
    // Predicated region
    $region30: #{tpu_custom_call.1} parent=1 // pred_check
      _
    $region31: #{tpu_custom_call.1} parent=1 // pred_check_branch
      %357 = sbr.rel (0) target = $region33
    $region32: #{tpu_custom_call.1} parent=1 // pred_region
      %s359 = ssub.s32 128, 128
      %360 = vsyncadd [#allocation9], %s359
      %s362 = sshll.u32 [#allocation10], 4
      %s363 = int_to_ptr.vmem [resolvable:$true] %s362
      %365 = dma.vmem_to_hbm [thread:$0]  %s363, 128, %s5, [#allocation9]
    $region33: #{tpu_custom_call.1} parent=1 // pred_fallthru
      _
    // Predicated region
    $region34: #{tpu_custom_call.1} parent=1 // pred_check
      _
    $region35: #{tpu_custom_call.1} parent=1 // pred_check_branch
      %367 = sbr.rel (0) target = $region37
    $region36: #{tpu_custom_call.1} parent=1 // pred_region
      %368 = dma.done [#allocation4], 128
    $region37: #{tpu_custom_call.1} parent=1 // pred_fallthru
      _
    // Predicated region
    $region38: #{tpu_custom_call.1} parent=1 // pred_check
      _
    $region39: #{tpu_custom_call.1} parent=1 // pred_check_branch
      %370 = sbr.rel (0) target = $region41
    $region40: #{tpu_custom_call.1} parent=1 // pred_region
      %371 = dma.done [#allocation9], 128
    $region41: #{tpu_custom_call.1} parent=1 // pred_fallthru
      _
    // Predicated region
    $region42: #{tpu_custom_call.1} parent=1 // pred_check
      _
    $region43: #{tpu_custom_call.1} parent=1 // pred_check_branch
      %373 = sbr.rel (0) target = $region45
    $region44: #{tpu_custom_call.1} parent=1 // pred_region
      %374 = dma.done [#allocation9], 128
    $region45: #{tpu_custom_call.1} parent=1 // pred_fallthru
      _
    %375 = vsyncpa [#allocation3], 1
    %376 = vsyncpa [#allocation6], 1
    %377 = vsyncpa [#allocation4], 1
    %378 = vsyncpa [#allocation9], 1

</llo_original>
